<compile_context>
chip_gen: v5e
topology: v5e:2x2
jax: 0.10.0
libtpu: 0.0.40
codegen_flags: <defaults>
</compile_context>

<pallas_src>
import functools

import jax
import jax.numpy as jnp
from jax.experimental import pallas as pl
from jax.experimental.pallas import tpu as pltpu


# ---------------------------------------------------------------------------
# Fused kernel: one image per grid step, all layers inside.
# ---------------------------------------------------------------------------
def _fused_conv_stack_kernel(x_ref, w_ref, b_ref, o_ref, act_ref, *,
                             H, WC, bypass_flags):
    """Fused stack of 3x3 same-conv + bias (+ residual) + ReLU layers.

    x_ref  : (1, H, WC)        input image, channels folded into lanes (WC = W*C)
    w_ref  : (L, 3, WC, WC)    banded conv matrices, one per layer per dy tap row
    b_ref  : (L, 1, WC)        bias tiled across W
    o_ref  : (1, H, WC)        output image
    act_ref: (H+2, WC) VMEM    zero-row-padded activation (rows 0 and H+1 stay 0)
    """
    L = len(bypass_flags)

    # Zero the padded activation buffer once, then drop the input into the
    # interior rows.  Rows 0 and H+1 are never written again -> 'same' padding
    # along H for every layer.
    act_ref[...] = jnp.zeros_like(act_ref)
    act_ref[pl.ds(1, H), :] = x_ref[0].astype(jnp.float32)

    for l in range(L):  # static unroll; L = conv_blocks_number + 2 (small)
        y = (jnp.dot(act_ref[pl.ds(0, H), :], w_ref[l, 0],
                     preferred_element_type=jnp.float32)
             + jnp.dot(act_ref[pl.ds(1, H), :], w_ref[l, 1],
                       preferred_element_type=jnp.float32)
             + jnp.dot(act_ref[pl.ds(2, H), :], w_ref[l, 2],
                       preferred_element_type=jnp.float32)
             + b_ref[l])
        if bypass_flags[l]:
            # residual add with this layer's input (requires Cin == Cout)
            y = y + act_ref[pl.ds(1, H), :]
        act_ref[pl.ds(1, H), :] = jnp.maximum(y, 0.0)

    o_ref[0] = act_ref[pl.ds(1, H), :].astype(o_ref.dtype)


# ---------------------------------------------------------------------------
# Weight preprocessing (pure JAX, done once outside the kernel).
# ---------------------------------------------------------------------------
def _build_banded_weight(weight, W):
    """(Cout, Cin, 3, 3) PyTorch conv weight -> (3, W*Cin, W*Cout) banded matrices.

    bigw[dy, w*Cin + ci, w2*Cout + co] = weight[co, ci, dy, w - w2 + 1]
    when 0 <= w - w2 + 1 <= 2, else 0.  The band structure performs both the
    dx sweep of the 3x3 kernel and the zero 'same' padding along W.
    """
    Cout, Cin = int(weight.shape[0]), int(weight.shape[1])
    wk = jnp.transpose(weight, (2, 3, 1, 0)).astype(jnp.float32)   # (3,3,Cin,Cout)
    dx = jnp.arange(W)[:, None] - jnp.arange(W)[None, :] + 1       # (W, W)
    valid = ((dx >= 0) & (dx <= 2)).astype(jnp.float32)
    blocks = wk[:, jnp.clip(dx, 0, 2)] * valid[None, :, :, None, None]  # (3,W,W,Cin,Cout)
    return jnp.transpose(blocks, (0, 1, 3, 2, 4)).reshape(3, W * Cin, W * Cout)


def _prepare_fused_params(params, W):
    layers = [params["conv_in"]] + list(params["blocks"]) + [params["conv_out"]]
    bigw = jnp.stack([_build_banded_weight(w, W) for (w, _) in layers])      # (L,3,WC,WC)
    bias = jnp.stack([jnp.tile(b.astype(jnp.float32), W).reshape(1, -1)
                      for (_, b) in layers])                                  # (L,1,WC)
    return bigw, bias


# ---------------------------------------------------------------------------
# Module forward (matches Module.forward semantics for the eval config).
# ---------------------------------------------------------------------------
def module_forward(params, x_nchw, *, bypass=False, max_pool=False,
                   dropout=False, batch_norm=False):
    if batch_norm:
        # TODO(synk): BatchNorm2d path (batch_norm=True) not implemented.
        raise NotImplementedError("batch_norm=True is not supported")

    N, C, H, W = x_nchw.shape
    n_blocks = len(params["blocks"])
    L = n_blocks + 2
    # The fused stacked-weight kernel requires equal channel counts per layer
    # (true for the module defaults: in = internal = out).
    for (w, _) in [params["conv_in"]] + list(params["blocks"]) + [params["conv_out"]]:
        assert w.shape[0] == C and w.shape[1] == C, w.shape

    WC = W * C
    bypass_flags = (False,) + (bool(bypass),) * n_blocks + (False,)

    # NCHW -> NHWC -> lane-dense (N, H, W*C)
    x = jnp.transpose(x_nchw, (0, 2, 3, 1)).reshape(N, H, WC).astype(jnp.float32)
    bigw, bias = _prepare_fused_params(params, W)

    kernel = functools.partial(_fused_conv_stack_kernel,
                               H=H, WC=WC, bypass_flags=bypass_flags)

    y = pl.pallas_call(
        kernel,
        out_shape=jax.ShapeDtypeStruct((N, H, WC), jnp.float32),
        grid_spec=pltpu.PrefetchScalarGridSpec(
            num_scalar_prefetch=0,
            grid=(N,),
            in_specs=[
                pl.BlockSpec((1, H, WC), lambda n: (n, 0, 0)),        # activations
                pl.BlockSpec((L, 3, WC, WC), lambda n: (0, 0, 0, 0)),  # all weights
                pl.BlockSpec((L, 1, WC), lambda n: (0, 0, 0)),        # all biases
            ],
            out_specs=pl.BlockSpec((1, H, WC), lambda n: (n, 0, 0)),
            scratch_shapes=[pltpu.VMEM((H + 2, WC), jnp.float32)],
        ),
        compiler_params=pltpu.CompilerParams(
            dimension_semantics=("parallel",)),
    )(x, bigw, bias)

    out = y.reshape(N, H, W, C)
    if max_pool:
        # MaxPool2d(kernel_size=2, stride=2) — plain JAX glue
        out = jax.lax.reduce_window(out, -jnp.inf, jax.lax.max,
                                    (1, 2, 2, 1), (1, 2, 2, 1), "VALID")
    if dropout:
        # TODO(synk): Dropout2d(0.1) is identity in eval mode; training-mode
        # stochastic channel dropout is not implemented here.
        pass
    # back to NCHW to match the PyTorch output convention
    return jnp.transpose(out, (0, 3, 1, 2))


# ---------------------------------------------------------------------------
# Parameter init (deterministic synthetic weights, PyTorch Conv2d layout).
# ---------------------------------------------------------------------------
def init_conv_params(key, in_channels, out_channels):
    kw, kb = jax.random.split(key)
    fan_in = in_channels * 9
    scale = 1.0 / jnp.sqrt(fan_in)
    weight = jax.random.uniform(kw, (out_channels, in_channels, 3, 3),
                                jnp.float32, -scale, scale)
    bias = jax.random.uniform(kb, (out_channels,), jnp.float32, -scale, scale)
    return weight, bias


def make_module_params(key, conv_blocks_number, in_channels, internal_channels,
                       out_channels):
    keys = jax.random.split(key, conv_blocks_number + 2)
    return {
        "conv_in": init_conv_params(keys[0], in_channels, internal_channels),
        "blocks": [init_conv_params(keys[1 + i], internal_channels, internal_channels)
                   for i in range(conv_blocks_number)],
        "conv_out": init_conv_params(keys[-1], internal_channels, out_channels),
    }


# ---------------------------------------------------------------------------
# Pure-JAX reference (for a correctness check of the Pallas kernel).
# ---------------------------------------------------------------------------
def _reference_forward(params, x_nchw, *, bypass=False):
    def block(x, w, b, byp):
        y = jax.lax.conv_general_dilated(
            x, w, window_strides=(1, 1), padding="SAME",
            dimension_numbers=("NCHW", "OIHW", "NCHW"))
        y = y + b[None, :, None, None]
        if byp:
            y = y + x
        return jnp.maximum(y, 0.0)

    w, b = params["conv_in"]
    x = block(x_nchw, w, b, False)
    for (w, b) in params["blocks"]:
        x = block(x, w, b, bypass)
    w, b = params["conv_out"]
    return block(x, w, b, False)


if __name__ == "__main__":
    key = jax.random.PRNGKey(0)
    k_params, k_x = jax.random.split(key)

    # Small shapes; W*C = 16*8 = 128 -> fully lane-dense activations.
    N, C, H, W = 2, 8, 16, 16
    conv_blocks_number = 2

    params = make_module_params(k_params, conv_blocks_number,
                                in_channels=C, internal_channels=C,
                                out_channels=C)
    x = jax.random.normal(k_x, (N, C, H, W), jnp.float32)

    y = module_forward(params, x, bypass=False, max_pool=False, dropout=False)
    y = jax.block_until_ready(y)
    assert y.shape == (N, C, H, W), y.shape

    y_ref = _reference_forward(params, x, bypass=False)
    max_err = float(jnp.max(jnp.abs(y - y_ref)))
    assert max_err < 2e-2, f"max abs err {max_err}"

    print("KERNEL_OK")
</pallas_src>

<mosaic_0001>
module attributes {stable_mosaic.version = 11 : i64} {
  func.func @_fused_conv_stack_kernel(%arg0: i32, %arg1: memref<1x16x128xf32, #tpu.memory_space<vmem>>, %arg2: memref<4x3x128x128xf32, #tpu.memory_space<vmem>>, %arg3: memref<4x1x128xf32, #tpu.memory_space<vmem>>, %arg4: memref<1x16x128xf32, #tpu.memory_space<vmem>>, %arg5: memref<18x128xf32, #tpu.memory_space<vmem>>) attributes {dimension_semantics = [#tpu.dimension_semantics<parallel>], iteration_bounds = array<i64: 2>, scalar_prefetch = 0 : i64, scratch_operands = 1 : i64, tpu.core_type = #tpu.core_type<tc>, window_params = [{transform_indices = @transform_0, window_bounds = array<i64: 1, 16, 128>}, {pipeline_mode = #tpu.pipeline_mode<synchronous>, transform_indices = @transform_1, window_bounds = array<i64: 4, 3, 128, 128>}, {pipeline_mode = #tpu.pipeline_mode<synchronous>, transform_indices = @transform_2, window_bounds = array<i64: 4, 1, 128>}, {transform_indices = @transform_3, window_bounds = array<i64: 1, 16, 128>}]} {
    %cst = arith.constant 0.000000e+00 : f32
    %0 = vector.broadcast %cst : f32 to vector<18x128xf32>
    %c0 = arith.constant 0 : index
    %c0_0 = arith.constant 0 : index
    %1 = vector.load %arg5[%c0, %c0_0] : memref<18x128xf32, #tpu.memory_space<vmem>>, vector<18x128xf32>
    tpu.vector_store %arg5[%c0, %c0_0], %0 {strides = array<i32>} : memref<18x128xf32, #tpu.memory_space<vmem>>, vector<18x128xf32>,
    %c0_1 = arith.constant 0 : index
    %c0_2 = arith.constant 0 : index
    %c0_3 = arith.constant 0 : index
    %2 = vector.load %arg1[%c0_1, %c0_2, %c0_3] : memref<1x16x128xf32, #tpu.memory_space<vmem>>, vector<1x16x128xf32>
    %3 = vector.shape_cast %2 : vector<1x16x128xf32> to vector<16x128xf32>
    %c1 = arith.constant 1 : index
    %c0_4 = arith.constant 0 : index
    %4 = vector.load %arg5[%c1, %c0_4] : memref<18x128xf32, #tpu.memory_space<vmem>>, vector<16x128xf32>
    tpu.vector_store %arg5[%c1, %c0_4], %3 {strides = array<i32>} : memref<18x128xf32, #tpu.memory_space<vmem>>, vector<16x128xf32>,
    %c0_5 = arith.constant 0 : index
    %c0_6 = arith.constant 0 : index
    %5 = vector.load %arg5[%c0_5, %c0_6] : memref<18x128xf32, #tpu.memory_space<vmem>>, vector<16x128xf32>
    %c0_7 = arith.constant 0 : index
    %c0_8 = arith.constant 0 : index
    %c0_9 = arith.constant 0 : index
    %c0_10 = arith.constant 0 : index
    %6 = vector.load %arg2[%c0_7, %c0_8, %c0_9, %c0_10] : memref<4x3x128x128xf32, #tpu.memory_space<vmem>>, vector<1x1x128x128xf32>
    %7 = vector.shape_cast %6 : vector<1x1x128x128xf32> to vector<128x128xf32>
    %cst_11 = arith.constant dense<0.000000e+00> : vector<16x128xf32>
    %8 = tpu.matmul %5, %7, %cst_11 {dimension_numbers = #tpu.dot_dimension_numbers<[1], [0], [0], [1], [0, 0, 1, 1], [], []>} : vector<16x128xf32>, vector<128x128xf32>, vector<16x128xf32> -> vector<16x128xf32>
    %c1_12 = arith.constant 1 : index
    %c0_13 = arith.constant 0 : index
    %9 = vector.load %arg5[%c1_12, %c0_13] : memref<18x128xf32, #tpu.memory_space<vmem>>, vector<16x128xf32>
    %c0_14 = arith.constant 0 : index
    %c1_15 = arith.constant 1 : index
    %c0_16 = arith.constant 0 : index
    %c0_17 = arith.constant 0 : index
    %10 = vector.load %arg2[%c0_14, %c1_15, %c0_16, %c0_17] : memref<4x3x128x128xf32, #tpu.memory_space<vmem>>, vector<1x1x128x128xf32>
    %11 = vector.shape_cast %10 : vector<1x1x128x128xf32> to vector<128x128xf32>
    %cst_18 = arith.constant dense<0.000000e+00> : vector<16x128xf32>
    %12 = tpu.matmul %9, %11, %cst_18 {dimension_numbers = #tpu.dot_dimension_numbers<[1], [0], [0], [1], [0, 0, 1, 1], [], []>} : vector<16x128xf32>, vector<128x128xf32>, vector<16x128xf32> -> vector<16x128xf32>
    %13 = arith.addf %8, %12 : vector<16x128xf32>
    %c2 = arith.constant 2 : index
    %c0_19 = arith.constant 0 : index
    %14 = vector.load %arg5[%c2, %c0_19] : memref<18x128xf32, #tpu.memory_space<vmem>>, vector<16x128xf32>
    %c0_20 = arith.constant 0 : index
    %c2_21 = arith.constant 2 : index
    %c0_22 = arith.constant 0 : index
    %c0_23 = arith.constant 0 : index
    %15 = vector.load %arg2[%c0_20, %c2_21, %c0_22, %c0_23] : memref<4x3x128x128xf32, #tpu.memory_space<vmem>>, vector<1x1x128x128xf32>
    %16 = vector.shape_cast %15 : vector<1x1x128x128xf32> to vector<128x128xf32>
    %cst_24 = arith.constant dense<0.000000e+00> : vector<16x128xf32>
    %17 = tpu.matmul %14, %16, %cst_24 {dimension_numbers = #tpu.dot_dimension_numbers<[1], [0], [0], [1], [0, 0, 1, 1], [], []>} : vector<16x128xf32>, vector<128x128xf32>, vector<16x128xf32> -> vector<16x128xf32>
    %18 = arith.addf %13, %17 : vector<16x128xf32>
    %c0_25 = arith.constant 0 : index
    %c0_26 = arith.constant 0 : index
    %c0_27 = arith.constant 0 : index
    %19 = vector.load %arg3[%c0_25, %c0_26, %c0_27] : memref<4x1x128xf32, #tpu.memory_space<vmem>>, vector<1x1x128xf32>
    %20 = vector.shape_cast %19 : vector<1x1x128xf32> to vector<1x128xf32>
    %21 = vector.broadcast %20 : vector<1x128xf32> to vector<16x128xf32>
    %22 = arith.addf %18, %21 : vector<16x128xf32>
    %cst_28 = arith.constant 0.000000e+00 : f32
    %23 = vector.broadcast %cst_28 : f32 to vector<16x128xf32>
    %24 = arith.maximumf %22, %23 : vector<16x128xf32>
    %c1_29 = arith.constant 1 : index
    %c0_30 = arith.constant 0 : index
    %25 = vector.load %arg5[%c1_29, %c0_30] : memref<18x128xf32, #tpu.memory_space<vmem>>, vector<16x128xf32>
    tpu.vector_store %arg5[%c1_29, %c0_30], %24 {strides = array<i32>} : memref<18x128xf32, #tpu.memory_space<vmem>>, vector<16x128xf32>,
    %c0_31 = arith.constant 0 : index
    %c0_32 = arith.constant 0 : index
    %26 = vector.load %arg5[%c0_31, %c0_32] : memref<18x128xf32, #tpu.memory_space<vmem>>, vector<16x128xf32>
    %c1_33 = arith.constant 1 : index
    %c0_34 = arith.constant 0 : index
    %c0_35 = arith.constant 0 : index
    %c0_36 = arith.constant 0 : index
    %27 = vector.load %arg2[%c1_33, %c0_34, %c0_35, %c0_36] : memref<4x3x128x128xf32, #tpu.memory_space<vmem>>, vector<1x1x128x128xf32>
    %28 = vector.shape_cast %27 : vector<1x1x128x128xf32> to vector<128x128xf32>
    %cst_37 = arith.constant dense<0.000000e+00> : vector<16x128xf32>
    %29 = tpu.matmul %26, %28, %cst_37 {dimension_numbers = #tpu.dot_dimension_numbers<[1], [0], [0], [1], [0, 0, 1, 1], [], []>} : vector<16x128xf32>, vector<128x128xf32>, vector<16x128xf32> -> vector<16x128xf32>
    %c1_38 = arith.constant 1 : index
    %c0_39 = arith.constant 0 : index
    %30 = vector.load %arg5[%c1_38, %c0_39] : memref<18x128xf32, #tpu.memory_space<vmem>>, vector<16x128xf32>
    %c1_40 = arith.constant 1 : index
    %c1_41 = arith.constant 1 : index
    %c0_42 = arith.constant 0 : index
    %c0_43 = arith.constant 0 : index
    %31 = vector.load %arg2[%c1_40, %c1_41, %c0_42, %c0_43] : memref<4x3x128x128xf32, #tpu.memory_space<vmem>>, vector<1x1x128x128xf32>
    %32 = vector.shape_cast %31 : vector<1x1x128x128xf32> to vector<128x128xf32>
    %cst_44 = arith.constant dense<0.000000e+00> : vector<16x128xf32>
    %33 = tpu.matmul %30, %32, %cst_44 {dimension_numbers = #tpu.dot_dimension_numbers<[1], [0], [0], [1], [0, 0, 1, 1], [], []>} : vector<16x128xf32>, vector<128x128xf32>, vector<16x128xf32> -> vector<16x128xf32>
    %34 = arith.addf %29, %33 : vector<16x128xf32>
    %c2_45 = arith.constant 2 : index
    %c0_46 = arith.constant 0 : index
    %35 = vector.load %arg5[%c2_45, %c0_46] : memref<18x128xf32, #tpu.memory_space<vmem>>, vector<16x128xf32>
    %c1_47 = arith.constant 1 : index
    %c2_48 = arith.constant 2 : index
    %c0_49 = arith.constant 0 : index
    %c0_50 = arith.constant 0 : index
    %36 = vector.load %arg2[%c1_47, %c2_48, %c0_49, %c0_50] : memref<4x3x128x128xf32, #tpu.memory_space<vmem>>, vector<1x1x128x128xf32>
    %37 = vector.shape_cast %36 : vector<1x1x128x128xf32> to vector<128x128xf32>
    %cst_51 = arith.constant dense<0.000000e+00> : vector<16x128xf32>
    %38 = tpu.matmul %35, %37, %cst_51 {dimension_numbers = #tpu.dot_dimension_numbers<[1], [0], [0], [1], [0, 0, 1, 1], [], []>} : vector<16x128xf32>, vector<128x128xf32>, vector<16x128xf32> -> vector<16x128xf32>
    %39 = arith.addf %34, %38 : vector<16x128xf32>
    %c1_52 = arith.constant 1 : index
    %c0_53 = arith.constant 0 : index
    %c0_54 = arith.constant 0 : index
    %40 = vector.load %arg3[%c1_52, %c0_53, %c0_54] : memref<4x1x128xf32, #tpu.memory_space<vmem>>, vector<1x1x128xf32>
    %41 = vector.shape_cast %40 : vector<1x1x128xf32> to vector<1x128xf32>
    %42 = vector.broadcast %41 : vector<1x128xf32> to vector<16x128xf32>
    %43 = arith.addf %39, %42 : vector<16x128xf32>
    %cst_55 = arith.constant 0.000000e+00 : f32
    %44 = vector.broadcast %cst_55 : f32 to vector<16x128xf32>
    %45 = arith.maximumf %43, %44 : vector<16x128xf32>
    %c1_56 = arith.constant 1 : index
    %c0_57 = arith.constant 0 : index
    %46 = vector.load %arg5[%c1_56, %c0_57] : memref<18x128xf32, #tpu.memory_space<vmem>>, vector<16x128xf32>
    tpu.vector_store %arg5[%c1_56, %c0_57], %45 {strides = array<i32>} : memref<18x128xf32, #tpu.memory_space<vmem>>, vector<16x128xf32>,
    %c0_58 = arith.constant 0 : index
    %c0_59 = arith.constant 0 : index
    %47 = vector.load %arg5[%c0_58, %c0_59] : memref<18x128xf32, #tpu.memory_space<vmem>>, vector<16x128xf32>
    %c2_60 = arith.constant 2 : index
    %c0_61 = arith.constant 0 : index
    %c0_62 = arith.constant 0 : index
    %c0_63 = arith.constant 0 : index
    %48 = vector.load %arg2[%c2_60, %c0_61, %c0_62, %c0_63] : memref<4x3x128x128xf32, #tpu.memory_space<vmem>>, vector<1x1x128x128xf32>
    %49 = vector.shape_cast %48 : vector<1x1x128x128xf32> to vector<128x128xf32>
    %cst_64 = arith.constant dense<0.000000e+00> : vector<16x128xf32>
    %50 = tpu.matmul %47, %49, %cst_64 {dimension_numbers = #tpu.dot_dimension_numbers<[1], [0], [0], [1], [0, 0, 1, 1], [], []>} : vector<16x128xf32>, vector<128x128xf32>, vector<16x128xf32> -> vector<16x128xf32>
    %c1_65 = arith.constant 1 : index
    %c0_66 = arith.constant 0 : index
    %51 = vector.load %arg5[%c1_65, %c0_66] : memref<18x128xf32, #tpu.memory_space<vmem>>, vector<16x128xf32>
    %c2_67 = arith.constant 2 : index
    %c1_68 = arith.constant 1 : index
    %c0_69 = arith.constant 0 : index
    %c0_70 = arith.constant 0 : index
    %52 = vector.load %arg2[%c2_67, %c1_68, %c0_69, %c0_70] : memref<4x3x128x128xf32, #tpu.memory_space<vmem>>, vector<1x1x128x128xf32>
    %53 = vector.shape_cast %52 : vector<1x1x128x128xf32> to vector<128x128xf32>
    %cst_71 = arith.constant dense<0.000000e+00> : vector<16x128xf32>
    %54 = tpu.matmul %51, %53, %cst_71 {dimension_numbers = #tpu.dot_dimension_numbers<[1], [0], [0], [1], [0, 0, 1, 1], [], []>} : vector<16x128xf32>, vector<128x128xf32>, vector<16x128xf32> -> vector<16x128xf32>
    %55 = arith.addf %50, %54 : vector<16x128xf32>
    %c2_72 = arith.constant 2 : index
    %c0_73 = arith.constant 0 : index
    %56 = vector.load %arg5[%c2_72, %c0_73] : memref<18x128xf32, #tpu.memory_space<vmem>>, vector<16x128xf32>
    %c2_74 = arith.constant 2 : index
    %c2_75 = arith.constant 2 : index
    %c0_76 = arith.constant 0 : index
    %c0_77 = arith.constant 0 : index
    %57 = vector.load %arg2[%c2_74, %c2_75, %c0_76, %c0_77] : memref<4x3x128x128xf32, #tpu.memory_space<vmem>>, vector<1x1x128x128xf32>
    %58 = vector.shape_cast %57 : vector<1x1x128x128xf32> to vector<128x128xf32>
    %cst_78 = arith.constant dense<0.000000e+00> : vector<16x128xf32>
    %59 = tpu.matmul %56, %58, %cst_78 {dimension_numbers = #tpu.dot_dimension_numbers<[1], [0], [0], [1], [0, 0, 1, 1], [], []>} : vector<16x128xf32>, vector<128x128xf32>, vector<16x128xf32> -> vector<16x128xf32>
    %60 = arith.addf %55, %59 : vector<16x128xf32>
    %c2_79 = arith.constant 2 : index
    %c0_80 = arith.constant 0 : index
    %c0_81 = arith.constant 0 : index
    %61 = vector.load %arg3[%c2_79, %c0_80, %c0_81] : memref<4x1x128xf32, #tpu.memory_space<vmem>>, vector<1x1x128xf32>
    %62 = vector.shape_cast %61 : vector<1x1x128xf32> to vector<1x128xf32>
    %63 = vector.broadcast %62 : vector<1x128xf32> to vector<16x128xf32>
    %64 = arith.addf %60, %63 : vector<16x128xf32>
    %cst_82 = arith.constant 0.000000e+00 : f32
    %65 = vector.broadcast %cst_82 : f32 to vector<16x128xf32>
    %66 = arith.maximumf %64, %65 : vector<16x128xf32>
    %c1_83 = arith.constant 1 : index
    %c0_84 = arith.constant 0 : index
    %67 = vector.load %arg5[%c1_83, %c0_84] : memref<18x128xf32, #tpu.memory_space<vmem>>, vector<16x128xf32>
    tpu.vector_store %arg5[%c1_83, %c0_84], %66 {strides = array<i32>} : memref<18x128xf32, #tpu.memory_space<vmem>>, vector<16x128xf32>,
    %c0_85 = arith.constant 0 : index
    %c0_86 = arith.constant 0 : index
    %68 = vector.load %arg5[%c0_85, %c0_86] : memref<18x128xf32, #tpu.memory_space<vmem>>, vector<16x128xf32>
    %c3 = arith.constant 3 : index
    %c0_87 = arith.constant 0 : index
    %c0_88 = arith.constant 0 : index
    %c0_89 = arith.constant 0 : index
    %69 = vector.load %arg2[%c3, %c0_87, %c0_88, %c0_89] : memref<4x3x128x128xf32, #tpu.memory_space<vmem>>, vector<1x1x128x128xf32>
    %70 = vector.shape_cast %69 : vector<1x1x128x128xf32> to vector<128x128xf32>
    %cst_90 = arith.constant dense<0.000000e+00> : vector<16x128xf32>
    %71 = tpu.matmul %68, %70, %cst_90 {dimension_numbers = #tpu.dot_dimension_numbers<[1], [0], [0], [1], [0, 0, 1, 1], [], []>} : vector<16x128xf32>, vector<128x128xf32>, vector<16x128xf32> -> vector<16x128xf32>
    %c1_91 = arith.constant 1 : index
    %c0_92 = arith.constant 0 : index
    %72 = vector.load %arg5[%c1_91, %c0_92] : memref<18x128xf32, #tpu.memory_space<vmem>>, vector<16x128xf32>
    %c3_93 = arith.constant 3 : index
    %c1_94 = arith.constant 1 : index
    %c0_95 = arith.constant 0 : index
    %c0_96 = arith.constant 0 : index
    %73 = vector.load %arg2[%c3_93, %c1_94, %c0_95, %c0_96] : memref<4x3x128x128xf32, #tpu.memory_space<vmem>>, vector<1x1x128x128xf32>
    %74 = vector.shape_cast %73 : vector<1x1x128x128xf32> to vector<128x128xf32>
    %cst_97 = arith.constant dense<0.000000e+00> : vector<16x128xf32>
    %75 = tpu.matmul %72, %74, %cst_97 {dimension_numbers = #tpu.dot_dimension_numbers<[1], [0], [0], [1], [0, 0, 1, 1], [], []>} : vector<16x128xf32>, vector<128x128xf32>, vector<16x128xf32> -> vector<16x128xf32>
    %76 = arith.addf %71, %75 : vector<16x128xf32>
    %c2_98 = arith.constant 2 : index
    %c0_99 = arith.constant 0 : index
    %77 = vector.load %arg5[%c2_98, %c0_99] : memref<18x128xf32, #tpu.memory_space<vmem>>, vector<16x128xf32>
    %c3_100 = arith.constant 3 : index
    %c2_101 = arith.constant 2 : index
    %c0_102 = arith.constant 0 : index
    %c0_103 = arith.constant 0 : index
    %78 = vector.load %arg2[%c3_100, %c2_101, %c0_102, %c0_103] : memref<4x3x128x128xf32, #tpu.memory_space<vmem>>, vector<1x1x128x128xf32>
    %79 = vector.shape_cast %78 : vector<1x1x128x128xf32> to vector<128x128xf32>
    %cst_104 = arith.constant dense<0.000000e+00> : vector<16x128xf32>
    %80 = tpu.matmul %77, %79, %cst_104 {dimension_numbers = #tpu.dot_dimension_numbers<[1], [0], [0], [1], [0, 0, 1, 1], [], []>} : vector<16x128xf32>, vector<128x128xf32>, vector<16x128xf32> -> vector<16x128xf32>
    %81 = arith.addf %76, %80 : vector<16x128xf32>
    %c3_105 = arith.constant 3 : index
    %c0_106 = arith.constant 0 : index
    %c0_107 = arith.constant 0 : index
    %82 = vector.load %arg3[%c3_105, %c0_106, %c0_107] : memref<4x1x128xf32, #tpu.memory_space<vmem>>, vector<1x1x128xf32>
    %83 = vector.shape_cast %82 : vector<1x1x128xf32> to vector<1x128xf32>
    %84 = vector.broadcast %83 : vector<1x128xf32> to vector<16x128xf32>
    %85 = arith.addf %81, %84 : vector<16x128xf32>
    %cst_108 = arith.constant 0.000000e+00 : f32
    %86 = vector.broadcast %cst_108 : f32 to vector<16x128xf32>
    %87 = arith.maximumf %85, %86 : vector<16x128xf32>
    %c1_109 = arith.constant 1 : index
    %c0_110 = arith.constant 0 : index
    %88 = vector.load %arg5[%c1_109, %c0_110] : memref<18x128xf32, #tpu.memory_space<vmem>>, vector<16x128xf32>
    tpu.vector_store %arg5[%c1_109, %c0_110], %87 {strides = array<i32>} : memref<18x128xf32, #tpu.memory_space<vmem>>, vector<16x128xf32>,
    %c1_111 = arith.constant 1 : index
    %c0_112 = arith.constant 0 : index
    %89 = vector.load %arg5[%c1_111, %c0_112] : memref<18x128xf32, #tpu.memory_space<vmem>>, vector<16x128xf32>
    %c0_113 = arith.constant 0 : index
    %c0_114 = arith.constant 0 : index
    %c0_115 = arith.constant 0 : index
    %90 = vector.load %arg4[%c0_113, %c0_114, %c0_115] : memref<1x16x128xf32, #tpu.memory_space<vmem>>, vector<1x16x128xf32>
    %91 = vector.shape_cast %90 : vector<1x16x128xf32> to vector<16x128xf32>
    %92 = vector.shape_cast %89 : vector<16x128xf32> to vector<1x16x128xf32>
    tpu.vector_store %arg4[%c0_113, %c0_114, %c0_115], %92 {strides = array<i32>} : memref<1x16x128xf32, #tpu.memory_space<vmem>>, vector<1x16x128xf32>,
    return
  }
  func.func @transform_0(%arg0: i32) -> (i32, i32, i32) {
    %c0_i32 = arith.constant 0 : i32
    %c0_i32_0 = arith.constant 0 : i32
    %c0_i32_1 = arith.constant 0 : i32
    return %arg0, %c0_i32, %c0_i32_0 : i32, i32, i32
  }
  func.func @transform_1(%arg0: i32) -> (i32, i32, i32, i32) {
    %c0_i32 = arith.constant 0 : i32
    %c0_i32_0 = arith.constant 0 : i32
    %c0_i32_1 = arith.constant 0 : i32
    %c0_i32_2 = arith.constant 0 : i32
    %c0_i32_3 = arith.constant 0 : i32
    return %c0_i32, %c0_i32_0, %c0_i32_1, %c0_i32_2 : i32, i32, i32, i32
  }
  func.func @transform_2(%arg0: i32) -> (i32, i32, i32) {
    %c0_i32 = arith.constant 0 : i32
    %c0_i32_0 = arith.constant 0 : i32
    %c0_i32_1 = arith.constant 0 : i32
    %c0_i32_2 = arith.constant 0 : i32
    return %c0_i32, %c0_i32_0, %c0_i32_1 : i32, i32, i32
  }
  func.func @transform_3(%arg0: i32) -> (i32, i32, i32) {
    %c0_i32 = arith.constant 0 : i32
    %c0_i32_0 = arith.constant 0 : i32
    %c0_i32_1 = arith.constant 0 : i32
    return %arg0, %c0_i32, %c0_i32_0 : i32, i32, i32
  }
}

</mosaic_0001>

<llo_original>
// kernel: tpu_custom_call.1
$region0: #{tpu_custom_call.1}
  #allocation0 [shape = 'u32[]', space=smem, size = 0x4, offset = 0x4, fixed_abs, tag = 'smem constant byte address 0x4 - core index']
  #allocation1 [shape = 'u32[72,128]{1,0:T(1,128)}', space=vmem, size = 0x9000, scoped, tag = 'internal scratch']
  #allocation2 [shape = 'f32[18,128]{1,0:T(8,128)}', space=vmem, size = 0x3000, scoped, tag = 'scratch operand']
  %s0 = inlined_call_operand.hbm [shape: f32[2,16,128], index: 0, kind: input, shape index: {}]
  %s1 = inlined_call_operand.hbm [shape: f32[4,3,128,128], index: 1, kind: input, shape index: {}]
  %s2 = inlined_call_operand.hbm [shape: f32[4,1,128], index: 2, kind: input, shape index: {}]
  %s3 = inlined_call_operand.hbm [shape: f32[2,16,128], index: 3, kind: output, shape index: {}]
  %s4 = sld [smem:[#allocation0]]
  $region57: #{tpu_custom_call.1} parent=0
    _
  %s6 = ssub.s32 1, %s4
  %s7 = scalar_select 0, %s6, %s4
  $region1: #{tpu_custom_call.1} parent=0
    #allocation3 [shape = 'u8[16384]{0}', space=vmem, size = 0x4000, scoped, tag = 'input window, operand 0']
    #allocation4 [shape = 's32[2]{0}', space=sflag, size = 0x8, scoped, tag = 'scoped memory for tpu_custom_call.1']
    #allocation5 [shape = 's32[2]{0}', space=sflag, size = 0x8, scoped, tag = 'scoped memory for tpu_custom_call.1']
    #allocation6 [shape = 'u8[786432]{0}', space=vmem, size = 0xc0000, scoped, tag = 'input window, operand 1, single buffered']
    #allocation7 [shape = 's32[1]{0}', space=sflag, size = 0x4, scoped, tag = 'scoped memory for tpu_custom_call.1']
    #allocation8 [shape = 'u8[2048]{0}', space=vmem, size = 0x800, scoped, tag = 'input window, operand 2, single buffered']
    #allocation9 [shape = 'u8[16384]{0}', space=vmem, size = 0x4000, scoped, tag = 'output window, operand 0']
    %8 = vsyncpa [#allocation4], 0
    %s9 = scalar_lea.sflag [#allocation4], 1
    %10 = vsyncpa %s9, 0
    %11 = vsyncpa [#allocation7], 0
    %12 = vsyncpa [#allocation5], 0
    %s13 = scalar_lea.sflag [#allocation5], 1
    %14 = vsyncpa %s13, 0
    loop: start=0, step=1, limit=4
    $region2: #{tpu_custom_call.1} parent=1 // loop_pre_header
      _
    $region3: #{tpu_custom_call.1} parent=1 // loop_header
      %s16 = sphi 0, %s20
      %p17 = scmp.ge.s32.totalorder %s16, 4
      %s26 = sphi 0, %s28
      %s29 = sphi 0, %s26
      %s30 = sphi 0, %s29
      %s46 = sphi 0, %s30
      %s50 = sphi 0, %s50
      %s52 = sphi 0, %s50
      %s53 = sphi 0, %s52
      %s67 = sphi 0, %s53
      %s71 = sphi 0, %s71
      %s73 = sphi 0, %s71
      %s74 = sphi 0, %s73
      %s88 = sphi 0, %s74
      %s94 = sphi 0, %s96
      %s97 = sphi 0, %s94
      %s98 = sphi 0, %s97
      %s114 = sphi 0, %s98
    $region4: #{tpu_custom_call.1} parent=1 // loop_header_branch
      %19 = sbr.rel (%p17) target = $region8
    $region5: #{tpu_custom_call.1} parent=1 // loop_body
      %s21 = ssub.s32 %s16, 1
      %s22 = ssub.s32 %s16, 2
      %s23 = sadd.s32 %s16, 1
      %s24 = ssub.s32 %s16, %s23
      %p25 = scmp.eq.s32.totalorder %s24, 0
      %s27 = sadd.s32 %s26, 1
      %s28 = scalar_select %p25, %s26, %s27
      %p31 = pneg %p25
      %p32 = scmp.eq.s32.totalorder %s16, 1
      %p33 = por %p31, %p32
      %p34 = scmp.ne.s32.totalorder %s26, %s29
      %p35 = scmp.eq.s32.totalorder %s16, 0
      %p36 = por %p34, %p35
      %p37 = scmp.ne.s32.totalorder %s26, %s29
      %p38 = scmp.eq.s32.totalorder %s21, 1
      %p39 = por %p37, %p38
      %p40 = scmp.ne.s32.totalorder %s29, %s30
      %p41 = scmp.eq.s32.totalorder %s21, 0
      %p42 = por %p40, %p41
      %p43 = scmp.ne.s32.totalorder %s29, %s30
      %p44 = scmp.eq.s32.totalorder %s22, 1
      %p45 = por %p43, %p44
      %p47 = scmp.ne.s32.totalorder %s30, %s46
      %p48 = scmp.eq.s32.totalorder %s22, 0
      %p49 = por %p47, %p48
      %s51 = sadd.s32 %s50, 1
      %p54 = scmp.eq.s32.totalorder %s16, 1
      %p55 = scmp.ne.s32.totalorder %s50, %s52
      %p56 = scmp.eq.s32.totalorder %s16, 0
      %p57 = por %p55, %p56
      %p58 = scmp.ne.s32.totalorder %s50, %s52
      %p59 = scmp.eq.s32.totalorder %s21, 1
      %p60 = por %p58, %p59
      %p61 = scmp.ne.s32.totalorder %s52, %s53
      %p62 = scmp.eq.s32.totalorder %s21, 0
      %p63 = por %p61, %p62
      %p64 = scmp.ne.s32.totalorder %s52, %s53
      %p65 = scmp.eq.s32.totalorder %s22, 1
      %p66 = por %p64, %p65
      %p68 = scmp.ne.s32.totalorder %s53, %s67
      %p69 = scmp.eq.s32.totalorder %s22, 0
      %p70 = por %p68, %p69
      %s72 = sadd.s32 %s71, 1
      %p75 = scmp.eq.s32.totalorder %s16, 1
      %p76 = scmp.ne.s32.totalorder %s71, %s73
      %p77 = scmp.eq.s32.totalorder %s16, 0
      %p78 = por %p76, %p77
      %p79 = scmp.ne.s32.totalorder %s71, %s73
      %p80 = scmp.eq.s32.totalorder %s21, 1
      %p81 = por %p79, %p80
      %p82 = scmp.ne.s32.totalorder %s73, %s74
      %p83 = scmp.eq.s32.totalorder %s21, 0
      %p84 = por %p82, %p83
      %p85 = scmp.ne.s32.totalorder %s73, %s74
      %p86 = scmp.eq.s32.totalorder %s22, 1
      %p87 = por %p85, %p86
      %p89 = scmp.ne.s32.totalorder %s74, %s88
      %p90 = scmp.eq.s32.totalorder %s22, 0
      %p91 = por %p89, %p90
      %s92 = ssub.s32 %s16, %s23
      %p93 = scmp.eq.s32.totalorder %s92, 0
      %s95 = sadd.s32 %s94, 1
      %s96 = scalar_select %p93, %s94, %s95
      %p99 = pneg %p93
      %p100 = scmp.eq.s32.totalorder %s16, 1
      %p101 = por %p99, %p100
      %p102 = scmp.ne.s32.totalorder %s94, %s97
      %p103 = scmp.eq.s32.totalorder %s16, 0
      %p104 = por %p102, %p103
      %p105 = scmp.ne.s32.totalorder %s94, %s97
      %p106 = scmp.eq.s32.totalorder %s21, 1
      %p107 = por %p105, %p106
      %p108 = scmp.ne.s32.totalorder %s97, %s98
      %p109 = scmp.eq.s32.totalorder %s21, 0
      %p110 = por %p108, %p109
      %p111 = scmp.ne.s32.totalorder %s97, %s98
      %p112 = scmp.eq.s32.totalorder %s22, 1
      %p113 = por %p111, %p112
      %p115 = scmp.ne.s32.totalorder %s98, %s114
      %p116 = scmp.eq.s32.totalorder %s22, 0
      %p117 = por %p115, %p116
      %p118 = scmp.le.s32.totalorder 1, %s16
      %p119 = scmp.lt.s32.totalorder %s16, 3
      %p120 = pnand %p118, %p119
      %p121 = pneg %p120
      // Predicated region
      $region9: #{tpu_custom_call.1} parent=5 // pred_check
        _
      $region10: #{tpu_custom_call.1} parent=5 // pred_check_branch
        %123 = sbr.rel (%p120) target = $region12
      $region11: #{tpu_custom_call.1} parent=5 // pred_region
        %s124 = ssub.s32 %s16, 1
        // Predicated region
        $region13: #{tpu_custom_call.1} parent=11 // pred_check
          %p125 = pneg %p63
        $region14: #{tpu_custom_call.1} parent=11 // pred_check_branch
          %127 = sbr.rel (%p125) target = $region16
        $region15: #{tpu_custom_call.1} parent=11 // pred_region
          %129 = vsyncadd [#allocation7], 0
          %s130 = sshll.u32 %s1, 4
          %s131 = int_to_ptr.hbm [resolvable:$true] %s130
          %s132 = sshll.u32 [#allocation6], 4
          %s133 = int_to_ptr.vmem [resolvable:$true] %s132
          %138 = dma.hbm_to_vmem [thread:$0]  %s131, 24576, %s133, [#allocation7], 128, 128, 8
        $region16: #{tpu_custom_call.1} parent=11 // pred_fallthru
          _
        // Predicated region
        $region17: #{tpu_custom_call.1} parent=11 // pred_check
          %p139 = pneg %p84
        $region18: #{tpu_custom_call.1} parent=11 // pred_check_branch
          %141 = sbr.rel (%p139) target = $region20
        $region19: #{tpu_custom_call.1} parent=11 // pred_region
          %143 = vsyncadd [#allocation7], 0
          %s144 = sshll.u32 %s2, 4
          %s145 = int_to_ptr.hbm [resolvable:$true] %s144
          %s146 = sshll.u32 [#allocation8], 4
          %s147 = int_to_ptr.vmem [resolvable:$true] %s146
          %152 = dma.hbm_to_vmem [thread:$0]  %s145, 64, %s147, [#allocation7], 16, 16, 1
        $region20: #{tpu_custom_call.1} parent=11 // pred_fallthru
          _
      $region12: #{tpu_custom_call.1} parent=5 // pred_fallthru
        _
      %p153 = scmp.lt.s32.totalorder %s16, 2
      // Predicated region
      $region21: #{tpu_custom_call.1} parent=5 // pred_check
        %p154 = pneg %p153
      $region22: #{tpu_custom_call.1} parent=5 // pred_check_branch
        %156 = sbr.rel (%p154) target = $region24
      $region23: #{tpu_custom_call.1} parent=5 // pred_region
        // Predicated region
        $region25: #{tpu_custom_call.1} parent=23 // pred_check
          %p157 = pneg %p36
        $region26: #{tpu_custom_call.1} parent=23 // pred_check_branch
          %159 = sbr.rel (%p157) target = $region28
        $region27: #{tpu_custom_call.1} parent=23 // pred_region
          %s160 = sand.u32 %s26, 1
          %s161 = scalar_lea.sflag [#allocation4], %s160
          %s162 = sand.u32 %s26, 1
          %s163 = smul.addr %s162, 16
          %s164 = scalar_lea.vmem [#allocation3], %s163
          %166 = vsyncadd %s161, 0
          %s167 = smul.addr %s16, 2
          %s168 = smul.addr %s167, 8
          %s169 = scalar_lea.hbm %s0, %s168
          %s170 = sshll.u32 %s169, 4
          %s171 = int_to_ptr.hbm [resolvable:$true] %s170
          %s172 = sshll.u32 %s164, 4
          %s173 = int_to_ptr.vmem [resolvable:$true] %s172
          %178 = dma.hbm_to_vmem [thread:$0]  %s171, 256, %s173, %s161, 128, 128, 8
        $region28: #{tpu_custom_call.1} parent=23 // pred_fallthru
          _
      $region24: #{tpu_custom_call.1} parent=5 // pred_fallthru
        _
      %p179 = scmp.le.s32.totalorder 1, %s16
      %p180 = scmp.lt.s32.totalorder %s16, 3
      %p181 = pnand %p179, %p180
      %p182 = pneg %p181
      // Predicated region
      $region29: #{tpu_custom_call.1} parent=5 // pred_check
        _
      $region30: #{tpu_custom_call.1} parent=5 // pred_check_branch
        %184 = sbr.rel (%p181) target = $region32
      $region31: #{tpu_custom_call.1} parent=5 // pred_region
        %s185 = ssub.s32 %s16, 1
        %s186 = sand.u32 %s29, 1
        %s187 = scalar_lea.sflag [#allocation4], %s186
        %s188 = sand.u32 %s29, 1
        %s189 = smul.addr %s188, 16
        %s190 = scalar_lea.vmem [#allocation3], %s189
        // Predicated region
        $region33: #{tpu_custom_call.1} parent=31 // pred_check
          %p191 = pneg %p42
        $region34: #{tpu_custom_call.1} parent=31 // pred_check_branch
          %193 = sbr.rel (%p191) target = $region36
        $region35: #{tpu_custom_call.1} parent=31 // pred_region
          %195 = dma.done %s187, 256
        $region36: #{tpu_custom_call.1} parent=31 // pred_fallthru
          _
        // Predicated region
        $region37: #{tpu_custom_call.1} parent=31 // pred_check
          %p196 = pneg %p63
        $region38: #{tpu_custom_call.1} parent=31 // pred_check_branch
          %198 = sbr.rel (%p196) target = $region40
        $region39: #{tpu_custom_call.1} parent=31 // pred_region
          %200 = dma.done [#allocation7], 24576
        $region40: #{tpu_custom_call.1} parent=31 // pred_fallthru
          _
        // Predicated region
        $region41: #{tpu_custom_call.1} parent=31 // pred_check
          %p201 = pneg %p84
        $region42: #{tpu_custom_call.1} parent=31 // pred_check_branch
          %203 = sbr.rel (%p201) target = $region44
        $region43: #{tpu_custom_call.1} parent=31 // pred_region
          %205 = dma.done [#allocation7], 64
        $region44: #{tpu_custom_call.1} parent=31 // pred_fallthru
          _
        %s206 = sand.u32 %s29, 1
        %s207 = scalar_lea.sflag [#allocation4], %s206
        %s208 = sand.u32 %s29, 1
        %s209 = smul.addr %s208, 16
        %s210 = scalar_lea.vmem [#allocation3], %s209
        %p211 = pneg %p42
        %p212 = pneg %p39
        %p213 = pneg %p63
        %p214 = pneg %p60
        %p215 = pneg %p84
        %p216 = pneg %p81
        %p217 = pneg %p110
        %p218 = pneg %p107
        %s219 = sand.u32 %s97, 1
        %s220 = scalar_lea.sflag [#allocation5], %s219
        %s221 = sand.u32 %s97, 1
        %s222 = smul.addr %s221, 16
        %s223 = scalar_lea.vmem [#allocation9], %s222
        %224 = vst [vmem:[#allocation2] sm:$0xff] 0.0
        %225 = vst [vmem:[#allocation2 + $0x8] sm:$0xff] 0.0
        %226 = vst [vmem:[#allocation2 + $0x10] sm:$0x3] 0.0
        %v227 = vld [vmem:[%s190] sm:$0xff]
        %v228 = vld [vmem:[%s190 + $0x8] sm:$0xff]
        %229 = vst [vmem:[#allocation2 + $0x1] sm:$0xff] %v227
        %230 = vst [vmem:[#allocation2 + $0x9] sm:$0xff] %v228
        %v231 = vld [vmem:[#allocation2] sm:$0xff]
        %v232 = vld [vmem:[#allocation2 + $0x8] sm:$0xff]
        %v233 = vld [vmem:[#allocation6] sm:$0xff]
        %v234 = vld [vmem:[#allocation6 + $0x8] sm:$0xff]
        %v235 = vld [vmem:[#allocation6 + $0x10] sm:$0xff]
        %v236 = vld [vmem:[#allocation6 + $0x18] sm:$0xff]
        %v237 = vld [vmem:[#allocation6 + $0x20] sm:$0xff]
        %v238 = vld [vmem:[#allocation6 + $0x28] sm:$0xff]
        %v239 = vld [vmem:[#allocation6 + $0x30] sm:$0xff]
        %v240 = vld [vmem:[#allocation6 + $0x38] sm:$0xff]
        %v241 = vld [vmem:[#allocation6 + $0x40] sm:$0xff]
        %v242 = vld [vmem:[#allocation6 + $0x48] sm:$0xff]
        %v243 = vld [vmem:[#allocation6 + $0x50] sm:$0xff]
        %v244 = vld [vmem:[#allocation6 + $0x58] sm:$0xff]
        %v245 = vld [vmem:[#allocation6 + $0x60] sm:$0xff]
        %v246 = vld [vmem:[#allocation6 + $0x68] sm:$0xff]
        %v247 = vld [vmem:[#allocation6 + $0x70] sm:$0xff]
        %v248 = vld [vmem:[#allocation6 + $0x78] sm:$0xff]
        %v249 = vld [vmem:[#allocation2 + $0x1] sm:$0xff]
        %v250 = vld [vmem:[#allocation2 + $0x9] sm:$0xff]
        %s251 = scalar_lea.vmem [#allocation6], 128
        %v252 = vld [vmem:[%s251] sm:$0xff]
        %v253 = vld [vmem:[%s251 + $0x8] sm:$0xff]
        %v254 = vld [vmem:[%s251 + $0x10] sm:$0xff]
        %v255 = vld [vmem:[%s251 + $0x18] sm:$0xff]
        %v256 = vld [vmem:[%s251 + $0x20] sm:$0xff]
        %v257 = vld [vmem:[%s251 + $0x28] sm:$0xff]
        %v258 = vld [vmem:[%s251 + $0x30] sm:$0xff]
        %v259 = vld [vmem:[%s251 + $0x38] sm:$0xff]
        %v260 = vld [vmem:[%s251 + $0x40] sm:$0xff]
        %v261 = vld [vmem:[%s251 + $0x48] sm:$0xff]
        %v262 = vld [vmem:[%s251 + $0x50] sm:$0xff]
        %v263 = vld [vmem:[%s251 + $0x58] sm:$0xff]
        %v264 = vld [vmem:[%s251 + $0x60] sm:$0xff]
        %v265 = vld [vmem:[%s251 + $0x68] sm:$0xff]
        %v266 = vld [vmem:[%s251 + $0x70] sm:$0xff]
        %v267 = vld [vmem:[%s251 + $0x78] sm:$0xff]
        %268 = vmatpush.msra.mxu0 %v267
        %269 = vmatpush.msra.mxu0 %v266
        %270 = vmatpush.msra.mxu0 %v265
        %271 = vmatpush.msra.mxu0 %v264
        %272 = vmatpush.msra.mxu0 %v263
        %273 = vmatpush.msra.mxu0 %v262
        %274 = vmatpush.msra.mxu0 %v261
        %275 = vmatpush.msra.mxu0 %v260
        %276 = vmatpush.msra.mxu0 %v259
        %277 = vmatpush.msra.mxu0 %v258
        %278 = vmatpush.msra.mxu0 %v257
        %279 = vmatpush.msra.mxu0 %v256
        %280 = vmatpush.msra.mxu0 %v255
        %281 = vmatpush.msra.mxu0 %v254
        %282 = vmatpush.msra.mxu0 %v253
        %283 = vmatpush.msra.mxu0 %v252
        %284 = vmatmul.f32.gmra.mxu0 %v249
        %v285 = vpop.f32.mrf.mxu0
        %v286 = vadd.f32 0.0, %v285
        %287 = vmatmul.f32.gmra.mxu0 %v250
        %v288 = vpop.f32.mrf.mxu0
        %v289 = vadd.f32 0.0, %v288
        %290 = vdwg.mxu0
        %291 = vmatpush.msra.mxu0 %v248
        %292 = vmatpush.msra.mxu0 %v247
        %293 = vmatpush.msra.mxu0 %v246
        %294 = vmatpush.msra.mxu0 %v245
        %295 = vmatpush.msra.mxu0 %v244
        %296 = vmatpush.msra.mxu0 %v243
        %297 = vmatpush.msra.mxu0 %v242
        %298 = vmatpush.msra.mxu0 %v241
        %299 = vmatpush.msra.mxu0 %v240
        %300 = vmatpush.msra.mxu0 %v239
        %301 = vmatpush.msra.mxu0 %v238
        %302 = vmatpush.msra.mxu0 %v237
        %303 = vmatpush.msra.mxu0 %v236
        %304 = vmatpush.msra.mxu0 %v235
        %305 = vmatpush.msra.mxu0 %v234
        %306 = vmatpush.msra.mxu0 %v233
        %307 = vmatmul.f32.gmra.mxu0 %v231
        %v308 = vpop.f32.mrf.mxu0
        %v309 = vadd.f32 %v286, %v308
        %310 = vmatmul.f32.gmra.mxu0 %v232
        %v311 = vpop.f32.mrf.mxu0
        %v312 = vadd.f32 %v289, %v311
        %313 = vdwg.mxu0
        %v314 = vld [vmem:[#allocation2 + $0x2] sm:$0xff]
        %v315 = vld [vmem:[#allocation2 + $0xa] sm:$0xff]
        %s316 = scalar_lea.vmem [#allocation6], 256
        %v317 = vld [vmem:[%s316] sm:$0xff]
        %v318 = vld [vmem:[%s316 + $0x8] sm:$0xff]
        %v319 = vld [vmem:[%s316 + $0x10] sm:$0xff]
        %v320 = vld [vmem:[%s316 + $0x18] sm:$0xff]
        %v321 = vld [vmem:[%s316 + $0x20] sm:$0xff]
        %v322 = vld [vmem:[%s316 + $0x28] sm:$0xff]
        %v323 = vld [vmem:[%s316 + $0x30] sm:$0xff]
        %v324 = vld [vmem:[%s316 + $0x38] sm:$0xff]
        %v325 = vld [vmem:[%s316 + $0x40] sm:$0xff]
        %v326 = vld [vmem:[%s316 + $0x48] sm:$0xff]
        %v327 = vld [vmem:[%s316 + $0x50] sm:$0xff]
        %v328 = vld [vmem:[%s316 + $0x58] sm:$0xff]
        %v329 = vld [vmem:[%s316 + $0x60] sm:$0xff]
        %v330 = vld [vmem:[%s316 + $0x68] sm:$0xff]
        %v331 = vld [vmem:[%s316 + $0x70] sm:$0xff]
        %v332 = vld [vmem:[%s316 + $0x78] sm:$0xff]
        %333 = vmatpush.msra.mxu0 %v332
        %334 = vmatpush.msra.mxu0 %v331
        %335 = vmatpush.msra.mxu0 %v330
        %336 = vmatpush.msra.mxu0 %v329
        %337 = vmatpush.msra.mxu0 %v328
        %338 = vmatpush.msra.mxu0 %v327
        %339 = vmatpush.msra.mxu0 %v326
        %340 = vmatpush.msra.mxu0 %v325
        %341 = vmatpush.msra.mxu0 %v324
        %342 = vmatpush.msra.mxu0 %v323
        %343 = vmatpush.msra.mxu0 %v322
        %344 = vmatpush.msra.mxu0 %v321
        %345 = vmatpush.msra.mxu0 %v320
        %346 = vmatpush.msra.mxu0 %v319
        %347 = vmatpush.msra.mxu0 %v318
        %348 = vmatpush.msra.mxu0 %v317
        %349 = vmatmul.f32.gmra.mxu0 %v314
        %v350 = vpop.f32.mrf.mxu0
        %v351 = vadd.f32 0.0, %v350
        %352 = vmatmul.f32.gmra.mxu0 %v315
        %v353 = vpop.f32.mrf.mxu0
        %v354 = vadd.f32 0.0, %v353
        %355 = vdwg.mxu0
        %v356 = vadd.f32 %v309, %v351
        %v357 = vadd.f32 %v312, %v354
        %v358 = vld [vmem:[#allocation8] sm:$0x1]
        %v360 = vperm.slane %v358, 0
        %v362 = vadd.f32 %v356, %v360
        %v363 = vadd.f32 %v357, %v360
        %v364 = vmax.f32 %v362, 0.0
        %v365 = vmax.f32 %v363, 0.0
        %366 = vst [vmem:[#allocation2 + $0x1] sm:$0xff] %v364
        %367 = vst [vmem:[#allocation2 + $0x9] sm:$0xff] %v365
        %v368 = vld [vmem:[#allocation2] sm:$0xff]
        %v369 = vld [vmem:[#allocation2 + $0x8] sm:$0xff]
        %s370 = scalar_lea.vmem [#allocation6], 384
        %v371 = vld [vmem:[%s370] sm:$0xff]
        %v372 = vld [vmem:[%s370 + $0x8] sm:$0xff]
        %v373 = vld [vmem:[%s370 + $0x10] sm:$0xff]
        %v374 = vld [vmem:[%s370 + $0x18] sm:$0xff]
        %v375 = vld [vmem:[%s370 + $0x20] sm:$0xff]
        %v376 = vld [vmem:[%s370 + $0x28] sm:$0xff]
        %v377 = vld [vmem:[%s370 + $0x30] sm:$0xff]
        %v378 = vld [vmem:[%s370 + $0x38] sm:$0xff]
        %v379 = vld [vmem:[%s370 + $0x40] sm:$0xff]
        %v380 = vld [vmem:[%s370 + $0x48] sm:$0xff]
        %v381 = vld [vmem:[%s370 + $0x50] sm:$0xff]
        %v382 = vld [vmem:[%s370 + $0x58] sm:$0xff]
        %v383 = vld [vmem:[%s370 + $0x60] sm:$0xff]
        %v384 = vld [vmem:[%s370 + $0x68] sm:$0xff]
        %v385 = vld [vmem:[%s370 + $0x70] sm:$0xff]
        %v386 = vld [vmem:[%s370 + $0x78] sm:$0xff]
        %v387 = vld [vmem:[#allocation2 + $0x1] sm:$0xff]
        %v388 = vld [vmem:[#allocation2 + $0x9] sm:$0xff]
        %s389 = scalar_lea.vmem [#allocation6], 512
        %v390 = vld [vmem:[%s389] sm:$0xff]
        %v391 = vld [vmem:[%s389 + $0x8] sm:$0xff]
        %v392 = vld [vmem:[%s389 + $0x10] sm:$0xff]
        %v393 = vld [vmem:[%s389 + $0x18] sm:$0xff]
        %v394 = vld [vmem:[%s389 + $0x20] sm:$0xff]
        %v395 = vld [vmem:[%s389 + $0x28] sm:$0xff]
        %v396 = vld [vmem:[%s389 + $0x30] sm:$0xff]
        %v397 = vld [vmem:[%s389 + $0x38] sm:$0xff]
        %v398 = vld [vmem:[%s389 + $0x40] sm:$0xff]
        %v399 = vld [vmem:[%s389 + $0x48] sm:$0xff]
        %v400 = vld [vmem:[%s389 + $0x50] sm:$0xff]
        %v401 = vld [vmem:[%s389 + $0x58] sm:$0xff]
        %v402 = vld [vmem:[%s389 + $0x60] sm:$0xff]
        %v403 = vld [vmem:[%s389 + $0x68] sm:$0xff]
        %v404 = vld [vmem:[%s389 + $0x70] sm:$0xff]
        %v405 = vld [vmem:[%s389 + $0x78] sm:$0xff]
        %406 = vmatpush.msra.mxu0 %v405
        %407 = vmatpush.msra.mxu0 %v404
        %408 = vmatpush.msra.mxu0 %v403
        %409 = vmatpush.msra.mxu0 %v402
        %410 = vmatpush.msra.mxu0 %v401
        %411 = vmatpush.msra.mxu0 %v400
        %412 = vmatpush.msra.mxu0 %v399
        %413 = vmatpush.msra.mxu0 %v398
        %414 = vmatpush.msra.mxu0 %v397
        %415 = vmatpush.msra.mxu0 %v396
        %416 = vmatpush.msra.mxu0 %v395
        %417 = vmatpush.msra.mxu0 %v394
        %418 = vmatpush.msra.mxu0 %v393
        %419 = vmatpush.msra.mxu0 %v392
        %420 = vmatpush.msra.mxu0 %v391
        %421 = vmatpush.msra.mxu0 %v390
        %422 = vmatmul.f32.gmra.mxu0 %v387
        %v423 = vpop.f32.mrf.mxu0
        %v424 = vadd.f32 0.0, %v423
        %425 = vmatmul.f32.gmra.mxu0 %v388
        %v426 = vpop.f32.mrf.mxu0
        %v427 = vadd.f32 0.0, %v426
        %428 = vdwg.mxu0
        %429 = vmatpush.msra.mxu0 %v386
        %430 = vmatpush.msra.mxu0 %v385
        %431 = vmatpush.msra.mxu0 %v384
        %432 = vmatpush.msra.mxu0 %v383
        %433 = vmatpush.msra.mxu0 %v382
        %434 = vmatpush.msra.mxu0 %v381
        %435 = vmatpush.msra.mxu0 %v380
        %436 = vmatpush.msra.mxu0 %v379
        %437 = vmatpush.msra.mxu0 %v378
        %438 = vmatpush.msra.mxu0 %v377
        %439 = vmatpush.msra.mxu0 %v376
        %440 = vmatpush.msra.mxu0 %v375
        %441 = vmatpush.msra.mxu0 %v374
        %442 = vmatpush.msra.mxu0 %v373
        %443 = vmatpush.msra.mxu0 %v372
        %444 = vmatpush.msra.mxu0 %v371
        %445 = vmatmul.f32.gmra.mxu0 %v368
        %v446 = vpop.f32.mrf.mxu0
        %v447 = vadd.f32 %v424, %v446
        %448 = vmatmul.f32.gmra.mxu0 %v369
        %v449 = vpop.f32.mrf.mxu0
        %v450 = vadd.f32 %v427, %v449
        %451 = vdwg.mxu0
        %v452 = vld [vmem:[#allocation2 + $0x2] sm:$0xff]
        %v453 = vld [vmem:[#allocation2 + $0xa] sm:$0xff]
        %s454 = scalar_lea.vmem [#allocation6], 640
        %v455 = vld [vmem:[%s454] sm:$0xff]
        %v456 = vld [vmem:[%s454 + $0x8] sm:$0xff]
        %v457 = vld [vmem:[%s454 + $0x10] sm:$0xff]
        %v458 = vld [vmem:[%s454 + $0x18] sm:$0xff]
        %v459 = vld [vmem:[%s454 + $0x20] sm:$0xff]
        %v460 = vld [vmem:[%s454 + $0x28] sm:$0xff]
        %v461 = vld [vmem:[%s454 + $0x30] sm:$0xff]
        %v462 = vld [vmem:[%s454 + $0x38] sm:$0xff]
        %v463 = vld [vmem:[%s454 + $0x40] sm:$0xff]
        %v464 = vld [vmem:[%s454 + $0x48] sm:$0xff]
        %v465 = vld [vmem:[%s454 + $0x50] sm:$0xff]
        %v466 = vld [vmem:[%s454 + $0x58] sm:$0xff]
        %v467 = vld [vmem:[%s454 + $0x60] sm:$0xff]
        %v468 = vld [vmem:[%s454 + $0x68] sm:$0xff]
        %v469 = vld [vmem:[%s454 + $0x70] sm:$0xff]
        %v470 = vld [vmem:[%s454 + $0x78] sm:$0xff]
        %471 = vmatpush.msra.mxu0 %v470
        %472 = vmatpush.msra.mxu0 %v469
        %473 = vmatpush.msra.mxu0 %v468
        %474 = vmatpush.msra.mxu0 %v467
        %475 = vmatpush.msra.mxu0 %v466
        %476 = vmatpush.msra.mxu0 %v465
        %477 = vmatpush.msra.mxu0 %v464
        %478 = vmatpush.msra.mxu0 %v463
        %479 = vmatpush.msra.mxu0 %v462
        %480 = vmatpush.msra.mxu0 %v461
        %481 = vmatpush.msra.mxu0 %v460
        %482 = vmatpush.msra.mxu0 %v459
        %483 = vmatpush.msra.mxu0 %v458
        %484 = vmatpush.msra.mxu0 %v457
        %485 = vmatpush.msra.mxu0 %v456
        %486 = vmatpush.msra.mxu0 %v455
        %487 = vmatmul.f32.gmra.mxu0 %v452
        %v488 = vpop.f32.mrf.mxu0
        %v489 = vadd.f32 0.0, %v488
        %490 = vmatmul.f32.gmra.mxu0 %v453
        %v491 = vpop.f32.mrf.mxu0
        %v492 = vadd.f32 0.0, %v491
        %493 = vdwg.mxu0
        %v494 = vadd.f32 %v447, %v489
        %v495 = vadd.f32 %v450, %v492
        %s496 = scalar_lea.vmem [#allocation8], 1
        %v497 = vld [vmem:[%s496] sm:$0x1]
        %v499 = vperm.slane %v497, 0
        %v501 = vadd.f32 %v494, %v499
        %v502 = vadd.f32 %v495, %v499
        %v503 = vmax.f32 %v501, 0.0
        %v504 = vmax.f32 %v502, 0.0
        %505 = vst [vmem:[#allocation2 + $0x1] sm:$0xff] %v503
        %506 = vst [vmem:[#allocation2 + $0x9] sm:$0xff] %v504
        %v507 = vld [vmem:[#allocation2] sm:$0xff]
        %v508 = vld [vmem:[#allocation2 + $0x8] sm:$0xff]
        %s509 = scalar_lea.vmem [#allocation6], 768
        %v510 = vld [vmem:[%s509] sm:$0xff]
        %v511 = vld [vmem:[%s509 + $0x8] sm:$0xff]
        %v512 = vld [vmem:[%s509 + $0x10] sm:$0xff]
        %v513 = vld [vmem:[%s509 + $0x18] sm:$0xff]
        %v514 = vld [vmem:[%s509 + $0x20] sm:$0xff]
        %v515 = vld [vmem:[%s509 + $0x28] sm:$0xff]
        %v516 = vld [vmem:[%s509 + $0x30] sm:$0xff]
        %v517 = vld [vmem:[%s509 + $0x38] sm:$0xff]
        %v518 = vld [vmem:[%s509 + $0x40] sm:$0xff]
        %v519 = vld [vmem:[%s509 + $0x48] sm:$0xff]
        %v520 = vld [vmem:[%s509 + $0x50] sm:$0xff]
        %v521 = vld [vmem:[%s509 + $0x58] sm:$0xff]
        %v522 = vld [vmem:[%s509 + $0x60] sm:$0xff]
        %v523 = vld [vmem:[%s509 + $0x68] sm:$0xff]
        %v524 = vld [vmem:[%s509 + $0x70] sm:$0xff]
        %v525 = vld [vmem:[%s509 + $0x78] sm:$0xff]
        %v526 = vld [vmem:[#allocation2 + $0x1] sm:$0xff]
        %v527 = vld [vmem:[#allocation2 + $0x9] sm:$0xff]
        %s528 = scalar_lea.vmem [#allocation6], 896
        %v529 = vld [vmem:[%s528] sm:$0xff]
        %v530 = vld [vmem:[%s528 + $0x8] sm:$0xff]
        %v531 = vld [vmem:[%s528 + $0x10] sm:$0xff]
        %v532 = vld [vmem:[%s528 + $0x18] sm:$0xff]
        %v533 = vld [vmem:[%s528 + $0x20] sm:$0xff]
        %v534 = vld [vmem:[%s528 + $0x28] sm:$0xff]
        %v535 = vld [vmem:[%s528 + $0x30] sm:$0xff]
        %v536 = vld [vmem:[%s528 + $0x38] sm:$0xff]
        %v537 = vld [vmem:[%s528 + $0x40] sm:$0xff]
        %v538 = vld [vmem:[%s528 + $0x48] sm:$0xff]
        %v539 = vld [vmem:[%s528 + $0x50] sm:$0xff]
        %v540 = vld [vmem:[%s528 + $0x58] sm:$0xff]
        %v541 = vld [vmem:[%s528 + $0x60] sm:$0xff]
        %v542 = vld [vmem:[%s528 + $0x68] sm:$0xff]
        %v543 = vld [vmem:[%s528 + $0x70] sm:$0xff]
        %v544 = vld [vmem:[%s528 + $0x78] sm:$0xff]
        %545 = vmatpush.msra.mxu0 %v544
        %546 = vmatpush.msra.mxu0 %v543
        %547 = vmatpush.msra.mxu0 %v542
        %548 = vmatpush.msra.mxu0 %v541
        %549 = vmatpush.msra.mxu0 %v540
        %550 = vmatpush.msra.mxu0 %v539
        %551 = vmatpush.msra.mxu0 %v538
        %552 = vmatpush.msra.mxu0 %v537
        %553 = vmatpush.msra.mxu0 %v536
        %554 = vmatpush.msra.mxu0 %v535
        %555 = vmatpush.msra.mxu0 %v534
        %556 = vmatpush.msra.mxu0 %v533
        %557 = vmatpush.msra.mxu0 %v532
        %558 = vmatpush.msra.mxu0 %v531
        %559 = vmatpush.msra.mxu0 %v530
        %560 = vmatpush.msra.mxu0 %v529
        %561 = vmatmul.f32.gmra.mxu0 %v526
        %v562 = vpop.f32.mrf.mxu0
        %v563 = vadd.f32 0.0, %v562
        %564 = vmatmul.f32.gmra.mxu0 %v527
        %v565 = vpop.f32.mrf.mxu0
        %v566 = vadd.f32 0.0, %v565
        %567 = vdwg.mxu0
        %568 = vmatpush.msra.mxu0 %v525
        %569 = vmatpush.msra.mxu0 %v524
        %570 = vmatpush.msra.mxu0 %v523
        %571 = vmatpush.msra.mxu0 %v522
        %572 = vmatpush.msra.mxu0 %v521
        %573 = vmatpush.msra.mxu0 %v520
        %574 = vmatpush.msra.mxu0 %v519
        %575 = vmatpush.msra.mxu0 %v518
        %576 = vmatpush.msra.mxu0 %v517
        %577 = vmatpush.msra.mxu0 %v516
        %578 = vmatpush.msra.mxu0 %v515
        %579 = vmatpush.msra.mxu0 %v514
        %580 = vmatpush.msra.mxu0 %v513
        %581 = vmatpush.msra.mxu0 %v512
        %582 = vmatpush.msra.mxu0 %v511
        %583 = vmatpush.msra.mxu0 %v510
        %584 = vmatmul.f32.gmra.mxu0 %v507
        %v585 = vpop.f32.mrf.mxu0
        %v586 = vadd.f32 %v563, %v585
        %587 = vmatmul.f32.gmra.mxu0 %v508
        %v588 = vpop.f32.mrf.mxu0
        %v589 = vadd.f32 %v566, %v588
        %590 = vdwg.mxu0
        %v591 = vld [vmem:[#allocation2 + $0x2] sm:$0xff]
        %v592 = vld [vmem:[#allocation2 + $0xa] sm:$0xff]
        %s593 = scalar_lea.vmem [#allocation6], 1024
        %v594 = vld [vmem:[%s593] sm:$0xff]
        %v595 = vld [vmem:[%s593 + $0x8] sm:$0xff]
        %v596 = vld [vmem:[%s593 + $0x10] sm:$0xff]
        %v597 = vld [vmem:[%s593 + $0x18] sm:$0xff]
        %v598 = vld [vmem:[%s593 + $0x20] sm:$0xff]
        %v599 = vld [vmem:[%s593 + $0x28] sm:$0xff]
        %v600 = vld [vmem:[%s593 + $0x30] sm:$0xff]
        %v601 = vld [vmem:[%s593 + $0x38] sm:$0xff]
        %v602 = vld [vmem:[%s593 + $0x40] sm:$0xff]
        %v603 = vld [vmem:[%s593 + $0x48] sm:$0xff]
        %v604 = vld [vmem:[%s593 + $0x50] sm:$0xff]
        %v605 = vld [vmem:[%s593 + $0x58] sm:$0xff]
        %v606 = vld [vmem:[%s593 + $0x60] sm:$0xff]
        %v607 = vld [vmem:[%s593 + $0x68] sm:$0xff]
        %v608 = vld [vmem:[%s593 + $0x70] sm:$0xff]
        %v609 = vld [vmem:[%s593 + $0x78] sm:$0xff]
        %610 = vmatpush.msra.mxu0 %v609
        %611 = vmatpush.msra.mxu0 %v608
        %612 = vmatpush.msra.mxu0 %v607
        %613 = vmatpush.msra.mxu0 %v606
        %614 = vmatpush.msra.mxu0 %v605
        %615 = vmatpush.msra.mxu0 %v604
        %616 = vmatpush.msra.mxu0 %v603
        %617 = vmatpush.msra.mxu0 %v602
        %618 = vmatpush.msra.mxu0 %v601
        %619 = vmatpush.msra.mxu0 %v600
        %620 = vmatpush.msra.mxu0 %v599
        %621 = vmatpush.msra.mxu0 %v598
        %622 = vmatpush.msra.mxu0 %v597
        %623 = vmatpush.msra.mxu0 %v596
        %624 = vmatpush.msra.mxu0 %v595
        %625 = vmatpush.msra.mxu0 %v594
        %626 = vmatmul.f32.gmra.mxu0 %v591
        %v627 = vpop.f32.mrf.mxu0
        %v628 = vadd.f32 0.0, %v627
        %629 = vmatmul.f32.gmra.mxu0 %v592
        %v630 = vpop.f32.mrf.mxu0
        %v631 = vadd.f32 0.0, %v630
        %632 = vdwg.mxu0
        %v633 = vadd.f32 %v586, %v628
        %v634 = vadd.f32 %v589, %v631
        %s635 = scalar_lea.vmem [#allocation8], 2
        %v636 = vld [vmem:[%s635] sm:$0x1]
        %v638 = vperm.slane %v636, 0
        %v640 = vadd.f32 %v633, %v638
        %v641 = vadd.f32 %v634, %v638
        %v642 = vmax.f32 %v640, 0.0
        %v643 = vmax.f32 %v641, 0.0
        %644 = vst [vmem:[#allocation2 + $0x1] sm:$0xff] %v642
        %645 = vst [vmem:[#allocation2 + $0x9] sm:$0xff] %v643
        %v646 = vld [vmem:[#allocation2] sm:$0xff]
        %v647 = vld [vmem:[#allocation2 + $0x8] sm:$0xff]
        %s648 = scalar_lea.vmem [#allocation6], 1152
        %v649 = vld [vmem:[%s648] sm:$0xff]
        %v650 = vld [vmem:[%s648 + $0x8] sm:$0xff]
        %v651 = vld [vmem:[%s648 + $0x10] sm:$0xff]
        %v652 = vld [vmem:[%s648 + $0x18] sm:$0xff]
        %v653 = vld [vmem:[%s648 + $0x20] sm:$0xff]
        %v654 = vld [vmem:[%s648 + $0x28] sm:$0xff]
        %v655 = vld [vmem:[%s648 + $0x30] sm:$0xff]
        %v656 = vld [vmem:[%s648 + $0x38] sm:$0xff]
        %v657 = vld [vmem:[%s648 + $0x40] sm:$0xff]
        %v658 = vld [vmem:[%s648 + $0x48] sm:$0xff]
        %v659 = vld [vmem:[%s648 + $0x50] sm:$0xff]
        %v660 = vld [vmem:[%s648 + $0x58] sm:$0xff]
        %v661 = vld [vmem:[%s648 + $0x60] sm:$0xff]
        %v662 = vld [vmem:[%s648 + $0x68] sm:$0xff]
        %v663 = vld [vmem:[%s648 + $0x70] sm:$0xff]
        %v664 = vld [vmem:[%s648 + $0x78] sm:$0xff]
        %v665 = vld [vmem:[#allocation2 + $0x1] sm:$0xff]
        %v666 = vld [vmem:[#allocation2 + $0x9] sm:$0xff]
        %s667 = scalar_lea.vmem [#allocation6], 1280
        %v668 = vld [vmem:[%s667] sm:$0xff]
        %v669 = vld [vmem:[%s667 + $0x8] sm:$0xff]
        %v670 = vld [vmem:[%s667 + $0x10] sm:$0xff]
        %v671 = vld [vmem:[%s667 + $0x18] sm:$0xff]
        %v672 = vld [vmem:[%s667 + $0x20] sm:$0xff]
        %v673 = vld [vmem:[%s667 + $0x28] sm:$0xff]
        %v674 = vld [vmem:[%s667 + $0x30] sm:$0xff]
        %v675 = vld [vmem:[%s667 + $0x38] sm:$0xff]
        %v676 = vld [vmem:[%s667 + $0x40] sm:$0xff]
        %v677 = vld [vmem:[%s667 + $0x48] sm:$0xff]
        %v678 = vld [vmem:[%s667 + $0x50] sm:$0xff]
        %v679 = vld [vmem:[%s667 + $0x58] sm:$0xff]
        %v680 = vld [vmem:[%s667 + $0x60] sm:$0xff]
        %v681 = vld [vmem:[%s667 + $0x68] sm:$0xff]
        %v682 = vld [vmem:[%s667 + $0x70] sm:$0xff]
        %v683 = vld [vmem:[%s667 + $0x78] sm:$0xff]
        %684 = vmatpush.msra.mxu0 %v683
        %685 = vmatpush.msra.mxu0 %v682
        %686 = vmatpush.msra.mxu0 %v681
        %687 = vmatpush.msra.mxu0 %v680
        %688 = vmatpush.msra.mxu0 %v679
        %689 = vmatpush.msra.mxu0 %v678
        %690 = vmatpush.msra.mxu0 %v677
        %691 = vmatpush.msra.mxu0 %v676
        %692 = vmatpush.msra.mxu0 %v675
        %693 = vmatpush.msra.mxu0 %v674
        %694 = vmatpush.msra.mxu0 %v673
        %695 = vmatpush.msra.mxu0 %v672
        %696 = vmatpush.msra.mxu0 %v671
        %697 = vmatpush.msra.mxu0 %v670
        %698 = vmatpush.msra.mxu0 %v669
        %699 = vmatpush.msra.mxu0 %v668
        %700 = vmatmul.f32.gmra.mxu0 %v665
        %v701 = vpop.f32.mrf.mxu0
        %v702 = vadd.f32 0.0, %v701
        %703 = vmatmul.f32.gmra.mxu0 %v666
        %v704 = vpop.f32.mrf.mxu0
        %v705 = vadd.f32 0.0, %v704
        %706 = vdwg.mxu0
        %707 = vmatpush.msra.mxu0 %v664
        %708 = vmatpush.msra.mxu0 %v663
        %709 = vmatpush.msra.mxu0 %v662
        %710 = vmatpush.msra.mxu0 %v661
        %711 = vmatpush.msra.mxu0 %v660
        %712 = vmatpush.msra.mxu0 %v659
        %713 = vmatpush.msra.mxu0 %v658
        %714 = vmatpush.msra.mxu0 %v657
        %715 = vmatpush.msra.mxu0 %v656
        %716 = vmatpush.msra.mxu0 %v655
        %717 = vmatpush.msra.mxu0 %v654
        %718 = vmatpush.msra.mxu0 %v653
        %719 = vmatpush.msra.mxu0 %v652
        %720 = vmatpush.msra.mxu0 %v651
        %721 = vmatpush.msra.mxu0 %v650
        %722 = vmatpush.msra.mxu0 %v649
        %723 = vmatmul.f32.gmra.mxu0 %v646
        %v724 = vpop.f32.mrf.mxu0
        %v725 = vadd.f32 %v702, %v724
        %726 = vmatmul.f32.gmra.mxu0 %v647
        %v727 = vpop.f32.mrf.mxu0
        %v728 = vadd.f32 %v705, %v727
        %729 = vdwg.mxu0
        %v730 = vld [vmem:[#allocation2 + $0x2] sm:$0xff]
        %v731 = vld [vmem:[#allocation2 + $0xa] sm:$0xff]
        %s732 = scalar_lea.vmem [#allocation6], 1408
        %v733 = vld [vmem:[%s732] sm:$0xff]
        %v734 = vld [vmem:[%s732 + $0x8] sm:$0xff]
        %v735 = vld [vmem:[%s732 + $0x10] sm:$0xff]
        %v736 = vld [vmem:[%s732 + $0x18] sm:$0xff]
        %v737 = vld [vmem:[%s732 + $0x20] sm:$0xff]
        %v738 = vld [vmem:[%s732 + $0x28] sm:$0xff]
        %v739 = vld [vmem:[%s732 + $0x30] sm:$0xff]
        %v740 = vld [vmem:[%s732 + $0x38] sm:$0xff]
        %v741 = vld [vmem:[%s732 + $0x40] sm:$0xff]
        %v742 = vld [vmem:[%s732 + $0x48] sm:$0xff]
        %v743 = vld [vmem:[%s732 + $0x50] sm:$0xff]
        %v744 = vld [vmem:[%s732 + $0x58] sm:$0xff]
        %v745 = vld [vmem:[%s732 + $0x60] sm:$0xff]
        %v746 = vld [vmem:[%s732 + $0x68] sm:$0xff]
        %v747 = vld [vmem:[%s732 + $0x70] sm:$0xff]
        %v748 = vld [vmem:[%s732 + $0x78] sm:$0xff]
        %749 = vmatpush.msra.mxu0 %v748
        %750 = vmatpush.msra.mxu0 %v747
        %751 = vmatpush.msra.mxu0 %v746
        %752 = vmatpush.msra.mxu0 %v745
        %753 = vmatpush.msra.mxu0 %v744
        %754 = vmatpush.msra.mxu0 %v743
        %755 = vmatpush.msra.mxu0 %v742
        %756 = vmatpush.msra.mxu0 %v741
        %757 = vmatpush.msra.mxu0 %v740
        %758 = vmatpush.msra.mxu0 %v739
        %759 = vmatpush.msra.mxu0 %v738
        %760 = vmatpush.msra.mxu0 %v737
        %761 = vmatpush.msra.mxu0 %v736
        %762 = vmatpush.msra.mxu0 %v735
        %763 = vmatpush.msra.mxu0 %v734
        %764 = vmatpush.msra.mxu0 %v733
        %765 = vmatmul.f32.gmra.mxu0 %v730
        %v766 = vpop.f32.mrf.mxu0
        %v767 = vadd.f32 0.0, %v766
        %768 = vmatmul.f32.gmra.mxu0 %v731
        %v769 = vpop.f32.mrf.mxu0
        %v770 = vadd.f32 0.0, %v769
        %771 = vdwg.mxu0
        %v772 = vadd.f32 %v725, %v767
        %v773 = vadd.f32 %v728, %v770
        %s774 = scalar_lea.vmem [#allocation8], 3
        %v775 = vld [vmem:[%s774] sm:$0x1]
        %v777 = vperm.slane %v775, 0
        %v779 = vadd.f32 %v772, %v777
        %v780 = vadd.f32 %v773, %v777
        %v781 = vmax.f32 %v779, 0.0
        %v782 = vmax.f32 %v780, 0.0
        %783 = vst [vmem:[#allocation2 + $0x1] sm:$0xff] %v781
        %784 = vst [vmem:[#allocation2 + $0x9] sm:$0xff] %v782
        %v785 = vld [vmem:[#allocation2 + $0x1] sm:$0xff]
        %v786 = vld [vmem:[#allocation2 + $0x9] sm:$0xff]
        %787 = vst [vmem:[%s223] sm:$0xff] %v785
        %788 = vst [vmem:[%s223 + $0x8] sm:$0xff] %v786
        %s789 = sand.u32 %s97, 1
        %s790 = scalar_lea.sflag [#allocation5], %s789
        %s791 = sand.u32 %s97, 1
        %s792 = smul.addr %s791, 16
        %s793 = scalar_lea.vmem [#allocation9], %s792
        // Predicated region
        $region45: #{tpu_custom_call.1} parent=31 // pred_check
          %p794 = pneg %p107
        $region46: #{tpu_custom_call.1} parent=31 // pred_check_branch
          %796 = sbr.rel (%p794) target = $region48
        $region47: #{tpu_custom_call.1} parent=31 // pred_region
          %798 = vsyncadd %s790, 0
          %s799 = smul.addr %s21, 2
          %s800 = smul.addr %s799, 8
          %s801 = scalar_lea.hbm %s3, %s800
          %s802 = sshll.u32 %s793, 4
          %s803 = int_to_ptr.vmem [resolvable:$true] %s802
          %s804 = sshll.u32 %s801, 4
          %s805 = int_to_ptr.hbm [resolvable:$true] %s804
          %810 = dma.vmem_to_hbm [thread:$0]  %s803, 256, %s805, %s790, 128, 128, 8
        $region48: #{tpu_custom_call.1} parent=31 // pred_fallthru
          _
      $region32: #{tpu_custom_call.1} parent=5 // pred_fallthru
        _
      %p811 = scmp.le.s32.totalorder 2, %s16
      // Predicated region
      $region49: #{tpu_custom_call.1} parent=5 // pred_check
        %p812 = pneg %p811
      $region50: #{tpu_custom_call.1} parent=5 // pred_check_branch
        %814 = sbr.rel (%p812) target = $region52
      $region51: #{tpu_custom_call.1} parent=5 // pred_region
        %s815 = ssub.s32 %s16, 2
        // Predicated region
        $region53: #{tpu_custom_call.1} parent=51 // pred_check
          %p816 = pneg %p113
        $region54: #{tpu_custom_call.1} parent=51 // pred_check_branch
          %818 = sbr.rel (%p816) target = $region56
        $region55: #{tpu_custom_call.1} parent=51 // pred_region
          %s819 = sand.u32 %s98, 1
          %s820 = scalar_lea.sflag [#allocation5], %s819
          %s821 = sand.u32 %s98, 1
          %s822 = smul.addr %s821, 16
          %s823 = scalar_lea.vmem [#allocation9], %s822
          %825 = dma.done %s820, 256
        $region56: #{tpu_custom_call.1} parent=51 // pred_fallthru
          _
      $region52: #{tpu_custom_call.1} parent=5 // pred_fallthru
        _
    $region6: #{tpu_custom_call.1} parent=1 // loop_footer
      %s20 = sadd.s32 1, %s16
    $region7: #{tpu_custom_call.1} parent=1 // loop_footer_branch
      %15 = sbr.rel target = $region3
    $region8: #{tpu_custom_call.1} parent=1 // loop_exit
      _
    %826 = vsyncpa [#allocation4], 1
    %s827 = scalar_lea.sflag [#allocation4], 1
    %828 = vsyncpa %s827, 1
    %829 = vsyncpa [#allocation7], 1
    %830 = vsyncpa [#allocation5], 1
    %s831 = scalar_lea.sflag [#allocation5], 1
    %832 = vsyncpa %s831, 1

</llo_original>
